<compile_context>
chip_gen: v7x
topology: tpu7x:2x2x1
jax: 0.10.0
libtpu: 0.0.40
codegen_flags: <defaults>
</compile_context>

<pallas_src>
import functools

import jax
import jax.numpy as jnp
from jax.experimental import pallas as pl
from jax.experimental.pallas import tpu as pltpu


def _acc_kernel(x_ref, y_ref, o_ref, acc_ref, *, pixels):
    i = pl.program_id(1)
    num_classes, tile = x_ref.shape

    @pl.when(i == 0)
    def _():
        acc_ref[...] = jnp.zeros_like(acc_ref)

    # Compute in f32 in-register (bf16/f16 -> f32 is exact, so argmax is
    # unchanged); HBM traffic stays at the native input dtype.
    x = x_ref[...].astype(jnp.float32)            # (C, tile)
    y = y_ref[...].astype(jnp.float32)            # (1, tile)

    # argmax over the class (sublane) axis with first-max tie-break:
    #   pred = min{ c : x[c] == max_c x[c] }
    max_val = jnp.max(x, axis=0, keepdims=True)                          # (1, tile)
    cls = jax.lax.broadcasted_iota(jnp.int32, x.shape, 0).astype(jnp.float32)
    cand = jnp.where(x == max_val, cls, jnp.float32(num_classes))
    pred = jnp.min(cand, axis=0, keepdims=True)                          # (1, tile)

    # Mask the ragged tail of the last pixel tile (its x/y contents are
    # unspecified since we do not pad on the host).
    col = i * tile + jax.lax.broadcasted_iota(jnp.int32, (1, tile), 1)
    correct = ((pred == y) & (col < pixels)).astype(jnp.int32)           # (1, tile)

    # Elementwise integer accumulation: exact and purely VPU in steady state.
    acc_ref[...] += correct

    @pl.when(i == pl.num_programs(1) - 1)
    def _():
        o_ref[...] = jnp.sum(acc_ref[...], axis=1, keepdims=True)        # (1, 1)


def multiclass_accuracy(x, y, *, tile=None):
    """x: (N, C, ...) float logits, y: (N, ...) int labels -> scalar float32."""
    N, C = x.shape[0], x.shape[1]
    L = 1
    for d in x.shape[2:]:
        L *= d

    x3 = x.reshape(N, C, L)                      # free (contiguous) reshape
    y3 = y.reshape(N, 1, L).astype(jnp.int32)    # labels are tiny

    if tile is None:
        # Aim for ~1 MiB per x block (double-buffered it stays well under the
        # default scoped-VMEM limit on v5e/v6e/v7x), cap lane width at 32K.
        dbytes = jnp.dtype(x.dtype).itemsize
        tile = (1 << 20) // max(1, C * dbytes)
    tile = min(tile, 32768, ((L + 127) // 128) * 128)   # no wider than needed
    tile = max(128, (tile // 128) * 128)                # lane-aligned
    num_tiles = pl.cdiv(L, tile)

    counts = pl.pallas_call(
        functools.partial(_acc_kernel, pixels=L),
        out_shape=jax.ShapeDtypeStruct((N, 1, 1), jnp.int32),
        grid_spec=pltpu.PrefetchScalarGridSpec(
            num_scalar_prefetch=0,
            grid=(N, num_tiles),
            in_specs=[
                pl.BlockSpec((None, C, tile), lambda n, i: (n, 0, i)),
                pl.BlockSpec((None, 1, tile), lambda n, i: (n, 0, i)),
            ],
            out_specs=pl.BlockSpec((None, 1, 1), lambda n, i: (n, 0, 0)),
            scratch_shapes=[pltpu.VMEM((1, tile), jnp.int32)],
        ),
        compiler_params=pltpu.CompilerParams(
            dimension_semantics=("parallel", "arbitrary")),
    )(x3, y3)

    total = N * L
    return counts.reshape(N).sum().astype(jnp.float32) / jnp.float32(total)


if __name__ == "__main__":
    key = jax.random.PRNGKey(0)
    kx, ky = jax.random.split(key)

    N, C, H, W = 2, 4, 16, 16
    x = jax.random.normal(kx, (N, C, H, W), dtype=jnp.float32)
    y = jax.random.randint(ky, (N, H, W), 0, C, dtype=jnp.int32)

    acc = multiclass_accuracy(x, y)
    acc = jax.block_until_ready(acc)

    # Pure-JAX reference for sanity checking.
    ref = jnp.mean((jnp.argmax(x, axis=1) == y).astype(jnp.float32))
    assert jnp.allclose(acc, ref, atol=1e-6), (acc, ref)

    print("KERNEL_OK")
</pallas_src>

<mosaic_0001>
module attributes {stable_mosaic.version = 11 : i64} {
  func.func @_acc_kernel(%arg0: i32, %arg1: i32, %arg2: memref<1x4x256xf32, #tpu.memory_space<vmem>>, %arg3: memref<1x1x256xi32, #tpu.memory_space<vmem>>, %arg4: memref<1x1x1xi32, #tpu.memory_space<vmem>>, %arg5: memref<1x256xi32, #tpu.memory_space<vmem>>) attributes {dimension_semantics = [#tpu.dimension_semantics<parallel>, #tpu.dimension_semantics<arbitrary>], iteration_bounds = array<i64: 2, 1>, scalar_prefetch = 0 : i64, scratch_operands = 1 : i64, tpu.core_type = #tpu.core_type<tc>, window_params = [{transform_indices = @transform_0, window_bounds = array<i64: 1, 4, 256>}, {transform_indices = @transform_1, window_bounds = array<i64: 1, 1, 256>}, {transform_indices = @transform_2, window_bounds = array<i64: 1, 1, 1>}]} {
    %c0_i32 = arith.constant 0 : i32
    %0 = arith.cmpi eq, %arg1, %c0_i32 : i32
    %1 = arith.extui %0 : i1 to i32
    %c0_i32_0 = arith.constant 0 : i32
    %2 = arith.cmpi ne, %1, %c0_i32_0 : i32
    scf.if %2 {
      %c0_i32_15 = arith.constant 0 : i32
      %33 = vector.broadcast %c0_i32_15 : i32 to vector<1x256xi32>
      %c0_16 = arith.constant 0 : index
      %c0_17 = arith.constant 0 : index
      %34 = vector.load %arg5[%c0_16, %c0_17] : memref<1x256xi32, #tpu.memory_space<vmem>>, vector<1x256xi32>
      tpu.vector_store %arg5[%c0_16, %c0_17], %33 {strides = array<i32>} : memref<1x256xi32, #tpu.memory_space<vmem>>, vector<1x256xi32>,
    } else {
    }
    %c0 = arith.constant 0 : index
    %c0_1 = arith.constant 0 : index
    %c0_2 = arith.constant 0 : index
    %3 = vector.load %arg2[%c0, %c0_1, %c0_2] : memref<1x4x256xf32, #tpu.memory_space<vmem>>, vector<1x4x256xf32>
    %4 = vector.shape_cast %3 : vector<1x4x256xf32> to vector<4x256xf32>
    %c0_3 = arith.constant 0 : index
    %c0_4 = arith.constant 0 : index
    %c0_5 = arith.constant 0 : index
    %5 = vector.load %arg3[%c0_3, %c0_4, %c0_5] : memref<1x1x256xi32, #tpu.memory_space<vmem>>, vector<1x1x256xi32>
    %6 = vector.shape_cast %5 : vector<1x1x256xi32> to vector<1x256xi32>
    %7 = arith.sitofp %6 : vector<1x256xi32> to vector<1x256xf32>
    %cst = arith.constant dense<0xFF800000> : vector<256xf32>
    %8 = vector.multi_reduction <maximumf>, %4, %cst [0] : vector<4x256xf32> to vector<256xf32>
    %9 = vector.shape_cast %8 : vector<256xf32> to vector<1x256xf32>
    %10 = tpu.iota {dimensions = array<i32: 0>} : vector<4x256xi32>
    %11 = arith.sitofp %10 : vector<4x256xi32> to vector<4x256xf32>
    %12 = vector.broadcast %9 : vector<1x256xf32> to vector<4x256xf32>
    %13 = arith.cmpf oeq, %4, %12 : vector<4x256xf32>
    %cst_6 = arith.constant 4.000000e+00 : f32
    %14 = vector.broadcast %cst_6 : f32 to vector<4x256xf32>
    %15 = arith.select %13, %11, %14 : vector<4x256xi1>, vector<4x256xf32>
    %cst_7 = arith.constant dense<0x7F800000> : vector<256xf32>
    %16 = vector.multi_reduction <minimumf>, %15, %cst_7 [0] : vector<4x256xf32> to vector<256xf32>
    %17 = vector.shape_cast %16 : vector<256xf32> to vector<1x256xf32>
    %c256_i32 = arith.constant 256 : i32
    %18 = arith.muli %arg1, %c256_i32 : i32
    %19 = tpu.iota {dimensions = array<i32: 1>} : vector<1x256xi32>
    %20 = vector.broadcast %18 : i32 to vector<1x256xi32>
    %21 = arith.addi %20, %19 : vector<1x256xi32>
    %22 = arith.cmpf oeq, %17, %7 : vector<1x256xf32>
    %c256_i32_8 = arith.constant 256 : i32
    %23 = vector.broadcast %c256_i32_8 : i32 to vector<1x256xi32>
    %24 = arith.cmpi slt, %21, %23 : vector<1x256xi32>
    %25 = arith.andi %22, %24 : vector<1x256xi1>
    %26 = arith.extui %25 : vector<1x256xi1> to vector<1x256xi32>
    %c0_9 = arith.constant 0 : index
    %c0_10 = arith.constant 0 : index
    %27 = vector.load %arg5[%c0_9, %c0_10] : memref<1x256xi32, #tpu.memory_space<vmem>>, vector<1x256xi32>
    %28 = arith.addi %27, %26 : vector<1x256xi32>
    %c0_11 = arith.constant 0 : index
    %c0_12 = arith.constant 0 : index
    %29 = vector.load %arg5[%c0_11, %c0_12] : memref<1x256xi32, #tpu.memory_space<vmem>>, vector<1x256xi32>
    tpu.vector_store %arg5[%c0_11, %c0_12], %28 {strides = array<i32>} : memref<1x256xi32, #tpu.memory_space<vmem>>, vector<1x256xi32>,
    %c0_i32_13 = arith.constant 0 : i32
    %30 = arith.cmpi eq, %arg1, %c0_i32_13 : i32
    %31 = arith.extui %30 : i1 to i32
    %c0_i32_14 = arith.constant 0 : i32
    %32 = arith.cmpi ne, %31, %c0_i32_14 : i32
    scf.if %32 {
      %c0_15 = arith.constant 0 : index
      %c0_16 = arith.constant 0 : index
      %33 = vector.load %arg5[%c0_15, %c0_16] : memref<1x256xi32, #tpu.memory_space<vmem>>, vector<1x256xi32>
      %cst_17 = arith.constant dense<0> : vector<1xi32>
      %34 = vector.multi_reduction <add>, %33, %cst_17 [1] : vector<1x256xi32> to vector<1xi32>
      %35 = vector.shape_cast %34 : vector<1xi32> to vector<1x1xi32>
      %c0_18 = arith.constant 0 : index
      %c0_19 = arith.constant 0 : index
      %c0_20 = arith.constant 0 : index
      %36 = vector.load %arg4[%c0_18, %c0_19, %c0_20] : memref<1x1x1xi32, #tpu.memory_space<vmem>>, vector<1x1x1xi32>
      %37 = vector.shape_cast %36 : vector<1x1x1xi32> to vector<1x1xi32>
      %38 = vector.shape_cast %35 : vector<1x1xi32> to vector<1x1x1xi32>
      tpu.vector_store %arg4[%c0_18, %c0_19, %c0_20], %38 {strides = array<i32>} : memref<1x1x1xi32, #tpu.memory_space<vmem>>, vector<1x1x1xi32>,
    } else {
    }
    return
  }
  func.func @transform_0(%arg0: i32, %arg1: i32) -> (i32, i32, i32) {
    %c0_i32 = arith.constant 0 : i32
    %c0_i32_0 = arith.constant 0 : i32
    return %arg0, %c0_i32, %arg1 : i32, i32, i32
  }
  func.func @transform_1(%arg0: i32, %arg1: i32) -> (i32, i32, i32) {
    %c0_i32 = arith.constant 0 : i32
    %c0_i32_0 = arith.constant 0 : i32
    return %arg0, %c0_i32, %arg1 : i32, i32, i32
  }
  func.func @transform_2(%arg0: i32, %arg1: i32) -> (i32, i32, i32) {
    %c0_i32 = arith.constant 0 : i32
    %c0_i32_0 = arith.constant 0 : i32
    %c0_i32_1 = arith.constant 0 : i32
    return %arg0, %c0_i32, %c0_i32_0 : i32, i32, i32
  }
}

</mosaic_0001>

<llo_original>
// kernel: tpu_custom_call.1
$region0: #{tpu_custom_call.1}
  #allocation0 [shape = 'u32[]', space=smem, size = 0x4, offset = 0x4, fixed_abs, tag = 'smem constant byte address 0x4 - core index']
  #allocation1 [shape = 'u32[144,128]{1,0:T(1,128)}', space=vmem, size = 0x12000, scoped, tag = 'internal scratch']
  #allocation2 [shape = 's32[1,256]{1,0:T(1,128)}', space=vmem, size = 0x400, scoped, tag = 'scratch operand']
  %s0 = inlined_call_operand.hbm [shape: f32[2,4,256], index: 0, kind: input, shape index: {}]
  %s1 = inlined_call_operand.hbm [shape: s32[2,1,256], index: 1, kind: input, shape index: {}]
  %s2 = inlined_call_operand.vmem [shape: s32[2,1,1], index: 2, kind: output, shape index: {}]
  %s3 = sld [smem:[#allocation0]]
  $region57: #{tpu_custom_call.1} parent=0
    _
  %s5 = ssub.s32 1, %s3
  %s6 = scalar_select 0, %s5, %s3
  $region1: #{tpu_custom_call.1} parent=0
    #allocation3 [shape = 'u8[8192]{0}', space=vmem, size = 0x2000, scoped, tag = 'input window, operand 0']
    #allocation4 [shape = 's32[2]{0}', space=sflag, size = 0x8, scoped, tag = 'scoped memory for tpu_custom_call.1']
    #allocation5 [shape = 'u8[2048]{0}', space=vmem, size = 0x800, scoped, tag = 'input window, operand 1']
    #allocation6 [shape = 's32[2]{0}', space=sflag, size = 0x8, scoped, tag = 'scoped memory for tpu_custom_call.1']
    %7 = vsyncpa [#allocation4], 0
    %s8 = scalar_lea.sflag [#allocation4], 1
    %9 = vsyncpa %s8, 0
    %10 = vsyncpa [#allocation6], 0
    %s11 = scalar_lea.sflag [#allocation6], 1
    %12 = vsyncpa %s11, 0
    loop: start=0, step=1, limit=4
    $region2: #{tpu_custom_call.1} parent=1 // loop_pre_header
      _
    $region3: #{tpu_custom_call.1} parent=1 // loop_header
      %s14 = sphi 0, %s18
      %p15 = scmp.ge.s32.totalorder %s14, 4
      %s21 = sphi 0, %s33
      %s22 = sphi 0, %s29
      %s23 = sphi 0, %s21
      %s24 = sphi 0, %s22
      %s25 = sphi 0, %s23
      %s26 = sphi 0, %s24
      %s38 = sphi 0, %s40
      %s41 = sphi 0, %s38
      %s42 = sphi 0, %s41
      %s58 = sphi 0, %s42
      %s66 = sphi 0, %s68
      %s69 = sphi 0, %s66
      %s70 = sphi 0, %s69
      %s86 = sphi 0, %s70
      %s92 = sphi 0, %s94
      %s95 = sphi 0, %s92
      %s96 = sphi 0, %s95
      %s112 = sphi 0, %s96
    $region4: #{tpu_custom_call.1} parent=1 // loop_header_branch
      %17 = sbr.rel (%p15) target = $region8
    $region5: #{tpu_custom_call.1} parent=1 // loop_body
      %s19 = ssub.s32 %s14, 1
      %s20 = ssub.s32 %s14, 2
      %s27 = sadd.s32 1, %s22
      %p28 = scmp.ge.s32.totalorder %s27, 1
      %s29 = scalar_select %p28, 0, %s27
      %s30 = sadd.s32 1, %s21
      %s31 = scalar_select %p28, %s30, %s21
      %p32 = scmp.ge.s32.totalorder %s31, 2
      %s33 = scalar_select %p32, 0, %s31
      %s34 = ssub.s32 %s21, %s33
      %s35 = ssub.s32 %s22, %s29
      %s36 = sor.u32 %s34, %s35
      %p37 = scmp.eq.s32.totalorder %s36, 0
      %s39 = sadd.s32 %s38, 1
      %s40 = scalar_select %p37, %s38, %s39
      %p43 = pneg %p37
      %p44 = scmp.eq.s32.totalorder %s14, 1
      %p45 = por %p43, %p44
      %p46 = scmp.ne.s32.totalorder %s38, %s41
      %p47 = scmp.eq.s32.totalorder %s14, 0
      %p48 = por %p46, %p47
      %p49 = scmp.ne.s32.totalorder %s38, %s41
      %p50 = scmp.eq.s32.totalorder %s19, 1
      %p51 = por %p49, %p50
      %p52 = scmp.ne.s32.totalorder %s41, %s42
      %p53 = scmp.eq.s32.totalorder %s19, 0
      %p54 = por %p52, %p53
      %p55 = scmp.ne.s32.totalorder %s41, %s42
      %p56 = scmp.eq.s32.totalorder %s20, 1
      %p57 = por %p55, %p56
      %p59 = scmp.ne.s32.totalorder %s42, %s58
      %p60 = scmp.eq.s32.totalorder %s20, 0
      %p61 = por %p59, %p60
      %s62 = ssub.s32 %s21, %s33
      %s63 = ssub.s32 %s22, %s29
      %s64 = sor.u32 %s62, %s63
      %p65 = scmp.eq.s32.totalorder %s64, 0
      %s67 = sadd.s32 %s66, 1
      %s68 = scalar_select %p65, %s66, %s67
      %p71 = pneg %p65
      %p72 = scmp.eq.s32.totalorder %s14, 1
      %p73 = por %p71, %p72
      %p74 = scmp.ne.s32.totalorder %s66, %s69
      %p75 = scmp.eq.s32.totalorder %s14, 0
      %p76 = por %p74, %p75
      %p77 = scmp.ne.s32.totalorder %s66, %s69
      %p78 = scmp.eq.s32.totalorder %s19, 1
      %p79 = por %p77, %p78
      %p80 = scmp.ne.s32.totalorder %s69, %s70
      %p81 = scmp.eq.s32.totalorder %s19, 0
      %p82 = por %p80, %p81
      %p83 = scmp.ne.s32.totalorder %s69, %s70
      %p84 = scmp.eq.s32.totalorder %s20, 1
      %p85 = por %p83, %p84
      %p87 = scmp.ne.s32.totalorder %s70, %s86
      %p88 = scmp.eq.s32.totalorder %s20, 0
      %p89 = por %p87, %p88
      %s90 = ssub.s32 %s21, %s33
      %p91 = scmp.eq.s32.totalorder %s90, 0
      %s93 = sadd.s32 %s92, 1
      %s94 = scalar_select %p91, %s92, %s93
      %p97 = pneg %p91
      %p98 = scmp.eq.s32.totalorder %s14, 1
      %p99 = por %p97, %p98
      %p100 = scmp.ne.s32.totalorder %s92, %s95
      %p101 = scmp.eq.s32.totalorder %s14, 0
      %p102 = por %p100, %p101
      %p103 = scmp.ne.s32.totalorder %s92, %s95
      %p104 = scmp.eq.s32.totalorder %s19, 1
      %p105 = por %p103, %p104
      %p106 = scmp.ne.s32.totalorder %s95, %s96
      %p107 = scmp.eq.s32.totalorder %s19, 0
      %p108 = por %p106, %p107
      %p109 = scmp.ne.s32.totalorder %s95, %s96
      %p110 = scmp.eq.s32.totalorder %s20, 1
      %p111 = por %p109, %p110
      %p113 = scmp.ne.s32.totalorder %s96, %s112
      %p114 = scmp.eq.s32.totalorder %s20, 0
      %p115 = por %p113, %p114
      %p116 = scmp.le.s32.totalorder 1, %s14
      %p117 = scmp.lt.s32.totalorder %s14, 3
      %p118 = pnand %p116, %p117
      %p119 = pneg %p118
      // Predicated region
      $region9: #{tpu_custom_call.1} parent=5 // pred_check
        _
      $region10: #{tpu_custom_call.1} parent=5 // pred_check_branch
        %121 = sbr.rel (%p118) target = $region12
      $region11: #{tpu_custom_call.1} parent=5 // pred_region
        %s122 = ssub.s32 %s14, 1
      $region12: #{tpu_custom_call.1} parent=5 // pred_fallthru
        _
      %p123 = scmp.lt.s32.totalorder %s14, 2
      // Predicated region
      $region13: #{tpu_custom_call.1} parent=5 // pred_check
        %p124 = pneg %p123
      $region14: #{tpu_custom_call.1} parent=5 // pred_check_branch
        %126 = sbr.rel (%p124) target = $region16
      $region15: #{tpu_custom_call.1} parent=5 // pred_region
        // Predicated region
        $region17: #{tpu_custom_call.1} parent=15 // pred_check
          %p127 = pneg %p48
        $region18: #{tpu_custom_call.1} parent=15 // pred_check_branch
          %129 = sbr.rel (%p127) target = $region20
        $region19: #{tpu_custom_call.1} parent=15 // pred_region
          %s130 = sand.u32 %s38, 1
          %s131 = scalar_lea.sflag [#allocation4], %s130
          %s132 = sand.u32 %s38, 1
          %s133 = smul.addr %s132, 8
          %s134 = scalar_lea.vmem [#allocation3], %s133
          %s135 = smul.u32 2, %s22
          %s137 = ssub.s32 128, 128
          %138 = vsyncadd %s131, %s137
          %s139 = smul.addr %s21, 2
          %s140 = sadd.s32 %s135, %s139
          %s141 = smul.addr %s140, 64
          %s142 = scalar_lea.hbm %s0, %s141
          %s144 = sshll.u32 %s134, 4
          %s145 = int_to_ptr.vmem [resolvable:$true] %s144
          %147 = dma.hbm_to_vmem [thread:$0]  %s142, 128, %s145, %s131
        $region20: #{tpu_custom_call.1} parent=15 // pred_fallthru
          _
        // Predicated region
        $region21: #{tpu_custom_call.1} parent=15 // pred_check
          %p148 = pneg %p76
        $region22: #{tpu_custom_call.1} parent=15 // pred_check_branch
          %150 = sbr.rel (%p148) target = $region24
        $region23: #{tpu_custom_call.1} parent=15 // pred_region
          %s151 = sand.u32 %s66, 1
          %s152 = scalar_lea.sflag [#allocation6], %s151
          %s153 = sand.u32 %s66, 1
          %s154 = smul.addr %s153, 2
          %s155 = scalar_lea.vmem [#allocation5], %s154
          %s156 = smul.u32 2, %s22
          %s158 = ssub.s32 32, 32
          %159 = vsyncadd %s152, %s158
          %s160 = smul.addr %s21, 2
          %s161 = sadd.s32 %s156, %s160
          %s162 = smul.addr %s161, 16
          %s163 = scalar_lea.hbm %s1, %s162
          %s165 = sshll.u32 %s155, 4
          %s166 = int_to_ptr.vmem [resolvable:$true] %s165
          %168 = dma.hbm_to_vmem [thread:$0]  %s163, 32, %s166, %s152
        $region24: #{tpu_custom_call.1} parent=15 // pred_fallthru
          _
      $region16: #{tpu_custom_call.1} parent=5 // pred_fallthru
        _
      %p169 = scmp.le.s32.totalorder 1, %s14
      %p170 = scmp.lt.s32.totalorder %s14, 3
      %p171 = pnand %p169, %p170
      %p172 = pneg %p171
      // Predicated region
      $region25: #{tpu_custom_call.1} parent=5 // pred_check
        _
      $region26: #{tpu_custom_call.1} parent=5 // pred_check_branch
        %174 = sbr.rel (%p171) target = $region28
      $region27: #{tpu_custom_call.1} parent=5 // pred_region
        %s175 = ssub.s32 %s14, 1
        %s176 = sand.u32 %s41, 1
        %s177 = scalar_lea.sflag [#allocation4], %s176
        %s178 = sand.u32 %s41, 1
        %s179 = smul.addr %s178, 8
        %s180 = scalar_lea.vmem [#allocation3], %s179
        // Predicated region
        $region29: #{tpu_custom_call.1} parent=27 // pred_check
          %p181 = pneg %p54
        $region30: #{tpu_custom_call.1} parent=27 // pred_check_branch
          %183 = sbr.rel (%p181) target = $region32
        $region31: #{tpu_custom_call.1} parent=27 // pred_region
          %184 = dma.done %s177, 128
        $region32: #{tpu_custom_call.1} parent=27 // pred_fallthru
          _
        %s185 = sand.u32 %s69, 1
        %s186 = scalar_lea.sflag [#allocation6], %s185
        %s187 = sand.u32 %s69, 1
        %s188 = smul.addr %s187, 2
        %s189 = scalar_lea.vmem [#allocation5], %s188
        // Predicated region
        $region33: #{tpu_custom_call.1} parent=27 // pred_check
          %p190 = pneg %p82
        $region34: #{tpu_custom_call.1} parent=27 // pred_check_branch
          %192 = sbr.rel (%p190) target = $region36
        $region35: #{tpu_custom_call.1} parent=27 // pred_region
          %193 = dma.done %s186, 32
        $region36: #{tpu_custom_call.1} parent=27 // pred_fallthru
          _
        %s194 = sand.u32 %s41, 1
        %s195 = scalar_lea.sflag [#allocation4], %s194
        %s196 = sand.u32 %s41, 1
        %s197 = smul.addr %s196, 8
        %s198 = scalar_lea.vmem [#allocation3], %s197
        %p199 = pneg %p54
        %p200 = pneg %p51
        %s201 = sand.u32 %s69, 1
        %s202 = scalar_lea.sflag [#allocation6], %s201
        %s203 = sand.u32 %s69, 1
        %s204 = smul.addr %s203, 2
        %s205 = scalar_lea.vmem [#allocation5], %s204
        %p206 = pneg %p82
        %p207 = pneg %p79
        %p208 = pneg %p108
        %p209 = pneg %p105
        %p210 = scmp.lt.s32.totalorder %s23, 1
        %s211 = scalar_select %p210, %s23, 1
        %s212 = scalar_lea.vmem %s2, %s211
        %s213 = smul.u32 2, %s24
        %s214 = smul.u32 2, %s24
        %p215 = scmp.lt.s32.totalorder %s23, 1
        %s216 = scalar_select %p215, %s23, 1
        %s217 = scalar_lea.vmem %s2, %s216
        %p218 = scmp.eq.s32.totalorder %s24, 0
        // Predicated region
        $region37: #{tpu_custom_call.1} parent=27 // pred_check
          %p219 = pneg %p218
        $region38: #{tpu_custom_call.1} parent=27 // pred_check_branch
          %221 = sbr.rel (%p219) target = $region40
        $region39: #{tpu_custom_call.1} parent=27 // pred_region
          %v222 = vlaneseq
          %vm223 = vcmp.ge.s32.totalorder %v222, 0
          %vm224 = vcmp.lt.s32.totalorder %v222, 256
          %vm225 = vmand %vm223, %vm224
          %226 = vst.msk [vmem:[#allocation2] sm:$0x3] %vm225, 0
        $region40: #{tpu_custom_call.1} parent=27 // pred_fallthru
          _
        %v227 = vld [vmem:[%s180] sm:$0xff]
        %v228 = vld [vmem:[%s189] sm:$0x3]
        %v229 = vcvt.s32.f32 %v228
        %v231 = vcombine.high %v227, %v227
        %vm233 = vcmask 1043456
        %v234 = vsel %vm233, %v227, -inf
        %v235 = vrot.slane %v234, 4
        %v236 = vmax.f32 %v234, %v235
        %v237 = vrot.slane %v236, 2
        %v238 = vmax.f32 %v236, %v237
        %v239 = vrot.slane %v238, 1
        %v240 = vmax.f32 %v238, %v239
        %v241 = vsel %vm233, %v231, -inf
        %v242 = vrot.slane %v241, 4
        %v243 = vmax.f32 %v241, %v242
        %v244 = vrot.slane %v243, 2
        %v245 = vmax.f32 %v243, %v244
        %v246 = vrot.slane %v245, 1
        %v247 = vmax.f32 %v245, %v246
        %v248 = vlaneseq
        %v249 = vshrl.u32 %v248, 7
        %v250 = vcvt.s32.f32 %v249
        %v253 = vcombine.low %v240, %v247
        %vm255 = vcmp.eq.f32.partialorder %v227, %v253
        %v258 = vunpack.c.l.s4 839922192
        %v259 = vunpack.c.0.s8 %v258
        %v260 = vlaneseq
        %v261 = vshrl.u32 %v260, 7
        %v262 = vsub.s32 %v259, %v261
        %v263 = vrot.slane %v250, %v262
        %v265 = vsel %vm255, %v263, 4.0
        %v267 = vcombine.high %v265, %v265
        %v269 = vsel %vm233, %v265, inf
        %v270 = vrot.slane %v269, 4
        %v271 = vmin.f32 %v269, %v270
        %v272 = vrot.slane %v271, 2
        %v273 = vmin.f32 %v271, %v272
        %v274 = vrot.slane %v273, 1
        %v275 = vmin.f32 %v273, %v274
        %v276 = vsel %vm233, %v267, inf
        %v277 = vrot.slane %v276, 4
        %v278 = vmin.f32 %v276, %v277
        %v279 = vrot.slane %v278, 2
        %v280 = vmin.f32 %v278, %v279
        %v281 = vrot.slane %v280, 1
        %v282 = vmin.f32 %v280, %v281
        %s283 = smul.u32 %s24, 256
        %v284 = vlaneseq
        %v285 = vand.u32 %v284, 127
        %v286 = vadd.s32 %v285, 128
        %v287 = vstv %s283
        %v288 = vadd.s32 %v287, %v285
        %v289 = vadd.s32 %v287, %v286
        %v291 = vlaneseq
        %v292 = vshrl.u32 %v291, 7
        %v293 = vsub.s32 0, %v292
        %v294 = vrot.slane %v229, %v293
        %v295 = vlaneseq
        %v296 = vshrl.u32 %v295, 7
        %v297 = vsub.s32 1, %v296
        %v298 = vrot.slane %v229, %v297
        %vm301 = vcmp.eq.f32.partialorder %v275, %v294
        %vm302 = vcmp.eq.f32.partialorder %v282, %v298
        %vm303 = vcmp.lt.s32.totalorder %v288, 256
        %vm304 = vcmp.lt.s32.totalorder %v289, 256
        %vm305 = vmand %vm301, %vm303
        %vm306 = vmand %vm302, %vm304
        %v307 = vsel %vm305, 1, 0
        %v308 = vsel %vm306, 1, 0
        %v309 = vld [vmem:[#allocation2] sm:$0x3]
        %v310 = vcombine.low %v307, %v308
        %v312 = vunpack.c.l.s4 1966171168
        %v313 = vunpack.c.0.s8 %v312
        %v314 = vlaneseq
        %v315 = vshrl.u32 %v314, 7
        %v316 = vsub.s32 %v313, %v315
        %v317 = vrot.slane %v310, %v316
        %v319 = vunpack.c.l.s4 1966171168
        %v320 = vunpack.c.0.s8 %v319
        %v321 = vlaneseq
        %v322 = vshrl.u32 %v321, 7
        %v323 = vsub.s32 %v320, %v322
        %v324 = vrot.slane %v317, %v323
        %v325 = vadd.s32 %v309, %v324
        %v326 = vlaneseq
        %vm327 = vcmp.ge.s32.totalorder %v326, 0
        %vm328 = vcmp.lt.s32.totalorder %v326, 256
        %vm329 = vmand %vm327, %vm328
        %330 = vst.msk [vmem:[#allocation2] sm:$0x3] %vm329, %v325
        // Predicated region
        $region41: #{tpu_custom_call.1} parent=27 // pred_check
          %p331 = pneg %p218
        $region42: #{tpu_custom_call.1} parent=27 // pred_check_branch
          %333 = sbr.rel (%p331) target = $region44
        $region43: #{tpu_custom_call.1} parent=27 // pred_region
          %v334 = vld [vmem:[#allocation2] sm:$0x3]
          %v335 = vlaneseq
          %v336 = vshrl.u32 %v335, 7
          %v337 = vsub.s32 0, %v336
          %v338 = vrot.slane %v334, %v337
          %v339 = vlaneseq
          %v340 = vshrl.u32 %v339, 7
          %v341 = vsub.s32 1, %v340
          %v342 = vrot.slane %v334, %v341
          %vm343 = vcmask 1040384
          %v344 = vsel %vm343, %v338, 0
          %v345 = vsel %vm343, %v342, 0
          %v346 = vadd.s32 %v344, %v345
          %v347 = vand.u32 %v346, 65535
          %v348 = vshrl.u32 %v346, 16
          %v349 = vcvt.s32.f32 %v347
          %v350 = vcvt.s32.f32 %v348
          %351 = vadd.xlane.f32.xlu0 %v349
          %v352 = vpop.xlane.xlu0 %351
          %353 = vadd.xlane.f32.xlu0 %v350
          %v354 = vpop.xlane.xlu0 %353
          %v355 = vcvt.f32.s32 %v352
          %v356 = vcvt.f32.s32 %v354
          %v357 = vshll.u32 %v356, 16
          %v358 = vadd.s32 %v357, %v355
          %vm359 = vcmask 0
          %360 = vst.msk [vmem:[%s217] sm:$0x1] %vm359, %v358
        $region44: #{tpu_custom_call.1} parent=27 // pred_fallthru
          _
        %p361 = scmp.lt.s32.totalorder %s23, 1
        %s362 = scalar_select %p361, %s23, 1
        %s363 = scalar_lea.vmem %s2, %s362
        // Predicated region
        $region45: #{tpu_custom_call.1} parent=27 // pred_check
          %p364 = pneg %p105
        $region46: #{tpu_custom_call.1} parent=27 // pred_check_branch
          %366 = sbr.rel (%p364) target = $region48
        $region47: #{tpu_custom_call.1} parent=27 // pred_region
          _
        $region48: #{tpu_custom_call.1} parent=27 // pred_fallthru
          _
      $region28: #{tpu_custom_call.1} parent=5 // pred_fallthru
        _
      %p367 = scmp.le.s32.totalorder 2, %s14
      // Predicated region
      $region49: #{tpu_custom_call.1} parent=5 // pred_check
        %p368 = pneg %p367
      $region50: #{tpu_custom_call.1} parent=5 // pred_check_branch
        %370 = sbr.rel (%p368) target = $region52
      $region51: #{tpu_custom_call.1} parent=5 // pred_region
        %s371 = ssub.s32 %s14, 2
        // Predicated region
        $region53: #{tpu_custom_call.1} parent=51 // pred_check
          %p372 = pneg %p111
        $region54: #{tpu_custom_call.1} parent=51 // pred_check_branch
          %374 = sbr.rel (%p372) target = $region56
        $region55: #{tpu_custom_call.1} parent=51 // pred_region
          %p375 = scmp.lt.s32.totalorder %s25, 1
          %s376 = scalar_select %p375, %s25, 1
          %s377 = scalar_lea.vmem %s2, %s376
        $region56: #{tpu_custom_call.1} parent=51 // pred_fallthru
          _
      $region52: #{tpu_custom_call.1} parent=5 // pred_fallthru
        _
    $region6: #{tpu_custom_call.1} parent=1 // loop_footer
      %s18 = sadd.s32 1, %s14
    $region7: #{tpu_custom_call.1} parent=1 // loop_footer_branch
      %13 = sbr.rel target = $region3
    $region8: #{tpu_custom_call.1} parent=1 // loop_exit
      _
    %378 = vsyncpa [#allocation4], 1
    %s379 = scalar_lea.sflag [#allocation4], 1
    %380 = vsyncpa %s379, 1
    %381 = vsyncpa [#allocation6], 1
    %s382 = scalar_lea.sflag [#allocation6], 1
    %383 = vsyncpa %s382, 1

</llo_original>
